<compile_context>
chip_gen: v7x
topology: tpu7x:2x2x1
jax: 0.10.0
libtpu: 0.0.40
codegen_flags: <defaults>
</compile_context>

<pallas_src>
import jax
import jax.numpy as jnp
from jax.experimental import pallas as pl
from jax.experimental.pallas import tpu as pltpu


def _regression_kernel(x_ref, a_ref, o_ref):
    # x_ref: (TILE_B, D) f32, a_ref: (1, D) f32, o_ref: (1, TILE_B) f32
    prod = x_ref[...] * a_ref[...]                 # VPU broadcast multiply
    row_sums = jnp.sum(prod, axis=-1)              # XLU lane reduce -> (TILE_B,)
    o_ref[...] = row_sums.reshape(1, -1).astype(o_ref.dtype)


def _pick_tile_b(batch: int, d: int) -> int:
    """Batch tile: full array when small, else lane-aligned and VMEM-safe."""
    if batch <= 512:
        return batch  # full-array block (exception to the (8,128) rule)
    # Keep a double-buffered f32 x tile well under the 32 MiB scoped-VMEM
    # default (and comfortable on v7x's 64 MiB physical VMEM).
    per_row_bytes = d * 4
    budget = 8 * 1024 * 1024  # bytes per single x buffer
    tile = max(128, min(2048, (budget // per_row_bytes) // 128 * 128))
    return tile


def regression_forward(x: jax.Array, A: jax.Array) -> jax.Array:
    """Pallas equivalent of RegressionModel.forward.

    x: (batch, model_size) f32
    A: (1, model_size) f32
    returns: (batch, 1) f32
    """
    B, D = x.shape
    tile_b = _pick_tile_b(B, D)
    n_blocks = pl.cdiv(B, tile_b)

    out_row = pl.pallas_call(
        _regression_kernel,
        out_shape=jax.ShapeDtypeStruct((1, B), x.dtype),
        grid_spec=pl.GridSpec(
            grid=(n_blocks,),
            in_specs=[
                pl.BlockSpec((tile_b, D), lambda i: (i, 0)),  # x tile
                pl.BlockSpec((1, D), lambda i: (0, 0)),        # A (resident)
            ],
            out_specs=pl.BlockSpec((1, tile_b), lambda i: (0, i)),
        ),
        compiler_params=pltpu.CompilerParams(
            dimension_semantics=("parallel",),
        ),
        cost_estimate=pl.CostEstimate(
            flops=2 * B * D,
            transcendentals=0,
            bytes_accessed=4 * (B * D + D + B),
        ),
    )(x, A)

    # Layout plumbing outside the kernel: (1, B) row slab -> (B, 1).
    return out_row.reshape(B, 1)


if __name__ == "__main__":
    model_size = 32
    batch = 8

    key = jax.random.PRNGKey(0)
    k_a, k_x = jax.random.split(key)

    # Deterministic parameter init (stand-in for torch.randn(1, model_size)).
    A = jax.random.normal(k_a, (1, model_size), dtype=jnp.float32)
    x = jax.random.normal(k_x, (batch, model_size), dtype=jnp.float32)

    out = regression_forward(x, A)
    out = jax.block_until_ready(out)

    # Reference check in plain JAX: A.mm(x.t()).t() == x @ A.T
    ref = x @ A.T
    assert out.shape == (batch, 1), out.shape
    assert jnp.allclose(out, ref, atol=1e-5, rtol=1e-5), "mismatch vs reference"

    print("KERNEL_OK")
</pallas_src>

<mosaic_0001>
module attributes {stable_mosaic.version = 11 : i64} {
  func.func @_regression_kernel(%arg0: i32, %arg1: memref<8x32xf32, #tpu.memory_space<vmem>>, %arg2: memref<1x32xf32, #tpu.memory_space<vmem>>, %arg3: memref<1x8xf32, #tpu.memory_space<vmem>>) attributes {dimension_semantics = [#tpu.dimension_semantics<parallel>], iteration_bounds = array<i64: 1>, scalar_prefetch = 0 : i64, scratch_operands = 0 : i64, tpu.core_type = #tpu.core_type<tc>, window_params = [{transform_indices = @transform_0, window_bounds = array<i64: 8, 32>}, {pipeline_mode = #tpu.pipeline_mode<synchronous>, transform_indices = @transform_1, window_bounds = array<i64: 1, 32>}, {transform_indices = @transform_2, window_bounds = array<i64: 1, 8>}]} {
    %c0 = arith.constant 0 : index
    %c0_0 = arith.constant 0 : index
    %0 = vector.load %arg1[%c0, %c0_0] : memref<8x32xf32, #tpu.memory_space<vmem>>, vector<8x32xf32>
    %c0_1 = arith.constant 0 : index
    %c0_2 = arith.constant 0 : index
    %1 = vector.load %arg2[%c0_1, %c0_2] : memref<1x32xf32, #tpu.memory_space<vmem>>, vector<1x32xf32>
    %2 = vector.broadcast %1 : vector<1x32xf32> to vector<8x32xf32>
    %3 = arith.mulf %0, %2 : vector<8x32xf32>
    %cst = arith.constant dense<0.000000e+00> : vector<8xf32>
    %4 = vector.multi_reduction <add>, %3, %cst [1] : vector<8x32xf32> to vector<8xf32>
    %5 = vector.shape_cast %4 : vector<8xf32> to vector<1x8xf32>
    %c0_3 = arith.constant 0 : index
    %c0_4 = arith.constant 0 : index
    %6 = vector.load %arg3[%c0_3, %c0_4] : memref<1x8xf32, #tpu.memory_space<vmem>>, vector<1x8xf32>
    tpu.vector_store %arg3[%c0_3, %c0_4], %5 {strides = array<i32>} : memref<1x8xf32, #tpu.memory_space<vmem>>, vector<1x8xf32>,
    return
  }
  func.func @transform_0(%arg0: i32) -> (i32, i32) {
    %c0_i32 = arith.constant 0 : i32
    %c0_i32_0 = arith.constant 0 : i32
    return %arg0, %c0_i32 : i32, i32
  }
  func.func @transform_1(%arg0: i32) -> (i32, i32) {
    %c0_i32 = arith.constant 0 : i32
    %c0_i32_0 = arith.constant 0 : i32
    %c0_i32_1 = arith.constant 0 : i32
    return %c0_i32, %c0_i32_0 : i32, i32
  }
  func.func @transform_2(%arg0: i32) -> (i32, i32) {
    %c0_i32 = arith.constant 0 : i32
    %c0_i32_0 = arith.constant 0 : i32
    return %c0_i32, %arg0 : i32, i32
  }
}

</mosaic_0001>

<llo_original>
// kernel: tpu_custom_call.1
$region0: #{tpu_custom_call.1}
  #allocation0 [shape = 'u32[]', space=smem, size = 0x4, offset = 0x4, fixed_abs, tag = 'smem constant byte address 0x4 - core index']
  #allocation1 [shape = 'u32[144,128]{1,0:T(1,128)}', space=vmem, size = 0x12000, scoped, tag = 'internal scratch']
  %s0 = inlined_call_operand.hbm [shape: f32[8,32], index: 0, kind: input, shape index: {}]
  %s1 = inlined_call_operand.vmem [shape: f32[1,32], index: 1, kind: input, shape index: {}]
  %s2 = inlined_call_operand.hbm [shape: f32[1,8], index: 2, kind: output, shape index: {}]
  %s3 = sld [smem:[#allocation0]]
  $region22: #{tpu_custom_call.1} parent=0
    _
  %s5 = ssub.s32 1, %s3
  %s6 = scalar_select 0, %s5, %s3
  $region1: #{tpu_custom_call.1} parent=0
    #allocation2 [shape = 'u8[4096]{0}', space=vmem, size = 0x1000, scoped, tag = 'input window, operand 0, single buffered']
    #allocation3 [shape = 's32[1]{0}', space=sflag, size = 0x4, scoped, tag = 'scoped memory for tpu_custom_call.1']
    #allocation4 [shape = 's32[1]{0}', space=sflag, size = 0x4, scoped, tag = 'scoped memory for tpu_custom_call.1']
    #allocation5 [shape = 'u8[512]{0}', space=vmem, size = 0x400, scoped, tag = 'output window, operand 0, single buffered']
    %7 = vsyncpa [#allocation3], 0
    %8 = vsyncpa [#allocation4], 0
    // Predicated region
    $region2: #{tpu_custom_call.1} parent=1 // pred_check
      _
    $region3: #{tpu_custom_call.1} parent=1 // pred_check_branch
      %10 = sbr.rel (0) target = $region5
    $region4: #{tpu_custom_call.1} parent=1 // pred_region
      %s12 = ssub.s32 128, 128
      %13 = vsyncadd [#allocation3], %s12
      %s15 = sshll.u32 [#allocation2], 4
      %s16 = int_to_ptr.vmem [resolvable:$true] %s15
      %18 = dma.hbm_to_vmem [thread:$0]  %s0, 128, %s16, [#allocation3]
    $region5: #{tpu_custom_call.1} parent=1 // pred_fallthru
      _
    // Predicated region
    $region6: #{tpu_custom_call.1} parent=1 // pred_check
      _
    $region7: #{tpu_custom_call.1} parent=1 // pred_check_branch
      %20 = sbr.rel (0) target = $region9
    $region8: #{tpu_custom_call.1} parent=1 // pred_region
      _
    $region9: #{tpu_custom_call.1} parent=1 // pred_fallthru
      _
    // Predicated region
    $region10: #{tpu_custom_call.1} parent=1 // pred_check
      _
    $region11: #{tpu_custom_call.1} parent=1 // pred_check_branch
      %22 = sbr.rel (0) target = $region13
    $region12: #{tpu_custom_call.1} parent=1 // pred_region
      %23 = dma.done [#allocation3], 128
    $region13: #{tpu_custom_call.1} parent=1 // pred_fallthru
      _
    %v24 = vld [vmem:[#allocation2] sm:$0xff]
    %v25 = vld [vmem:[%s1] sm:$0x1]
    %v27 = vlaneseq
    %v28 = vshrl.u32 %v27, 7
    %v29 = vsub.s32 0, %v28
    %v30 = vrot.slane %v25, %v29
    %v32 = vmul.f32 %v24, %v30
    %vm33 = vcmask 261120
    %v34 = vsel %vm33, %v32, 0.0
    %35 = vadd.xlane.f32.xlu0 %v34
    %v36 = vpop.xlane.xlu0 %35
    %v38 = vlaneseq
    %v39 = vand.u32 %v38, 127
    %v40 = vlaneseq
    %v41 = vshrl.u32 %v40, 7
    %v42 = vsub.s32 %v39, %v41
    %v43 = vrot.slane %v36, %v42
    %vm45 = vcmask 57344
    %46 = vst.msk [vmem:[#allocation5] sm:$0x1] %vm45, %v43
    // Predicated region
    $region14: #{tpu_custom_call.1} parent=1 // pred_check
      _
    $region15: #{tpu_custom_call.1} parent=1 // pred_check_branch
      %48 = sbr.rel (0) target = $region17
    $region16: #{tpu_custom_call.1} parent=1 // pred_region
      %s50 = ssub.s32 16, 16
      %51 = vsyncadd [#allocation4], %s50
      %s53 = sshll.u32 [#allocation5], 4
      %s54 = int_to_ptr.vmem [resolvable:$true] %s53
      %56 = dma.vmem_to_hbm [thread:$0]  %s54, 16, %s2, [#allocation4]
    $region17: #{tpu_custom_call.1} parent=1 // pred_fallthru
      _
    // Predicated region
    $region18: #{tpu_custom_call.1} parent=1 // pred_check
      _
    $region19: #{tpu_custom_call.1} parent=1 // pred_check_branch
      %58 = sbr.rel (0) target = $region21
    $region20: #{tpu_custom_call.1} parent=1 // pred_region
      %59 = dma.done [#allocation4], 16
    $region21: #{tpu_custom_call.1} parent=1 // pred_fallthru
      _
    %60 = vsyncpa [#allocation3], 1
    %61 = vsyncpa [#allocation4], 1

</llo_original>
